<compile_context>
chip_gen: v5e
topology: v5e:2x2
jax: 0.10.0
libtpu: 0.0.40
codegen_flags: <defaults>
</compile_context>

<pallas_src>
import math

import jax
import jax.numpy as jnp
from jax.experimental import pallas as pl
from jax.experimental.pallas import tpu as pltpu

_LANE = 128
# Safe on every generation: well below v7x's 64 MiB physical VMEM, and raises
# the 16 MiB default scoped limit on v5e.  Actual double-buffered working set
# with ~4 MiB blocks is ~18 MiB.
_VMEM_LIMIT_BYTES = 48 * 1024 * 1024
_TARGET_BLOCK_BYTES = 4 * 1024 * 1024  # ~85% of HBM roofline for an f32 add


# ----------------------------- Pallas kernels --------------------------------

def _pe_add_lane_kernel(x_ref, pe_ref, o_ref):
    # x_ref: (N, TILE)  batch on sublanes, fused seq*dim on lanes
    # pe_ref: (1, TILE) positional-encoding slab for this lane tile
    o_ref[...] = x_ref[...] + pe_ref[...]          # (1, T) broadcasts over sublanes


def _pe_add_seq_kernel(x_ref, pe_ref, o_ref):
    # x_ref: (N, ts, D)  seq tile on sublanes, dim on lanes (small-batch path)
    # pe_ref: (ts, D)
    o_ref[...] = x_ref[...] + pe_ref[...]          # (ts, D) broadcasts over batch


# ------------------------------ Tile selection --------------------------------

def _pick_lane_tile(total, n_rows, itemsize, target_block_bytes=_TARGET_BLOCK_BYTES):
    """128-multiple lane tile with (n_rows, tile) block <= ~target bytes.
    Does NOT need to divide `total` (ragged last block is masked by Pallas).
    Capped at ~total/2 so the "parallel" grid has >=2 tiles (v7x dual-TC)."""
    max_lanes = max(_LANE,
                    (target_block_bytes // max(1, n_rows * itemsize)) // _LANE * _LANE)
    half = (total // 2) // _LANE * _LANE
    if half >= _LANE:
        max_lanes = min(max_lanes, half)
    if total <= max_lanes:
        return total                                # full extent: always legal
    return max_lanes


def _pick_seq_tile(seq, n_rows, dim, itemsize, target_block_bytes=_TARGET_BLOCK_BYTES):
    """Sublane-aligned seq tile for the 3-D (N, ts, D) small-batch path."""
    sub = 8 if itemsize >= 4 else (16 if itemsize == 2 else 32)
    max_rows = max(sub,
                   (target_block_bytes // max(1, n_rows * dim * itemsize)) // sub * sub)
    half = (seq // 2) // sub * sub
    if half >= sub:
        max_rows = min(max_rows, half)
    if seq <= max_rows:
        return seq                                  # full extent: always legal
    return max_rows


# ------------------------------ pallas_call wrappers ---------------------------

def _pallas_add_pos_encoding_lane(x2d, pe2d, alias_input=False):
    # x2d: (N, S*D), pe2d: (1, S*D)
    N, T = x2d.shape
    tile_l = _pick_lane_tile(T, N, jnp.dtype(x2d.dtype).itemsize)
    grid = (pl.cdiv(T, tile_l),)
    kwargs = {}
    if alias_input:
        # Only worthwhile when the caller can actually donate x; otherwise XLA
        # inserts a defensive copy, so this is off by default.
        kwargs["input_output_aliases"] = {0: 0}
    return pl.pallas_call(
        _pe_add_lane_kernel,
        out_shape=jax.ShapeDtypeStruct((N, T), x2d.dtype),
        grid_spec=pltpu.PrefetchScalarGridSpec(
            num_scalar_prefetch=0,
            grid=grid,
            in_specs=[
                pl.BlockSpec((N, tile_l), lambda j: (0, j)),
                pl.BlockSpec((1, tile_l), lambda j: (0, j)),
            ],
            out_specs=pl.BlockSpec((N, tile_l), lambda j: (0, j)),
        ),
        compiler_params=pltpu.CompilerParams(
            dimension_semantics=("parallel",),
            vmem_limit_bytes=_VMEM_LIMIT_BYTES),
        **kwargs,
    )(x2d, pe2d)


def _pallas_add_pos_encoding_seq(x, pe):
    # Small-batch path: x (N, S, D) with D % 128 == 0, pe (S, D).
    N, S, D = x.shape
    ts = _pick_seq_tile(S, N, D, jnp.dtype(x.dtype).itemsize)
    grid = (pl.cdiv(S, ts),)
    return pl.pallas_call(
        _pe_add_seq_kernel,
        out_shape=jax.ShapeDtypeStruct((N, S, D), x.dtype),
        grid_spec=pltpu.PrefetchScalarGridSpec(
            num_scalar_prefetch=0,
            grid=grid,
            in_specs=[
                pl.BlockSpec((N, ts, D), lambda j: (0, j, 0)),
                pl.BlockSpec((ts, D), lambda j: (j, 0)),
            ],
            out_specs=pl.BlockSpec((N, ts, D), lambda j: (0, j, 0)),
        ),
        compiler_params=pltpu.CompilerParams(
            dimension_semantics=("parallel",),
            vmem_limit_bytes=_VMEM_LIMIT_BYTES),
    )(x, pe)


# --------------------------- Module equivalent -------------------------------

class PositionalEncoding:
    """JAX/Pallas equivalent of src_xl.layers.PositionalEncoding.

    forward(x): out[i, j, :] = x[i, j, :] + pe[j, :], matching the torch
    transpose -> add pe[:x.size(1)] -> transpose-back sequence exactly.
    """

    def __init__(self, length, dim):
        assert dim % 2 == 0, "dim must be even (same constraint as the torch module)"
        self.length = length
        self.dim = dim
        position = jnp.arange(length, dtype=jnp.float32)[:, None]              # (L, 1)
        div_term = jnp.exp(jnp.arange(0, dim, 2, dtype=jnp.float32)
                           * (-math.log(10000.0) / dim))                        # (D/2,)
        pe = jnp.zeros((length, dim), dtype=jnp.float32)
        pe = pe.at[:, 0::2].set(jnp.sin(position * div_term))
        pe = pe.at[:, 1::2].set(jnp.cos(position * div_term))
        self.pe = pe                                                            # (L, D)
        self._pe_cache = {}                                                     # (S, dtype) -> (S, D)

    def _pe_slice(self, S, dtype):
        key = (int(S), jnp.dtype(dtype).name)
        cached = self._pe_cache.get(key)
        if cached is None:
            # NOTE: the add runs in x.dtype (output keeps x's dtype); for f32
            # inputs this matches torch bit-for-bit semantics.
            cached = jnp.asarray(self.pe[:S], dtype=dtype)
            self._pe_cache[key] = cached
        return cached

    def __call__(self, x):
        # x: (batch, seq, dim) -> (batch, seq, dim)
        N, S, D = x.shape
        assert D == self.dim, "embedding dim mismatch"
        assert S <= self.length, "sequence longer than the registered pe buffer"
        itemsize = jnp.dtype(x.dtype).itemsize
        pe = self._pe_slice(S, x.dtype)                       # (S, D)

        small_batch = N < (8 if itemsize >= 4 else 16)
        if D % _LANE == 0 and small_batch:
            # Seq on sublanes, dim on lanes: full vregs / unmasked stores even
            # for batch 1-2.
            return _pallas_add_pos_encoding_seq(x, pe)

        # General path: fuse (seq, dim) into one contiguous lane-dense axis.
        # Contiguous reshapes are metadata-only (no transpose, no HBM copy).
        x2d = x.reshape(N, S * D)
        pe2d = pe.reshape(1, S * D)
        out2d = _pallas_add_pos_encoding_lane(x2d, pe2d)
        return out2d.reshape(N, S, D)


# --------------------------------- Reference ---------------------------------

def _reference_forward(x, pe):
    # Replicates the torch forward literally: transpose, add pe[:size], transpose back.
    pe3 = pe[:, None, :]                            # (L, 1, D) like the torch buffer
    out = jnp.transpose(x, (1, 0, 2)) + pe3[: x.shape[1]]
    return jnp.transpose(out, (1, 0, 2))


# ----------------------------------- Main ------------------------------------

if __name__ == "__main__":
    key = jax.random.PRNGKey(0)

    # Primary shape (matches the module spec: [batch, seq, dim]).
    batch, seq, dim, max_len = 2, 8, 32, 16
    x = jax.random.normal(key, (batch, seq, dim), dtype=jnp.float32)
    posenc = PositionalEncoding(max_len, dim)
    out = jax.block_until_ready(posenc(x))
    ref = _reference_forward(x, posenc.pe)
    assert out.shape == (batch, seq, dim)
    assert jnp.allclose(out, ref, atol=1e-6, rtol=1e-6)

    # Extra small check: ragged lane tiling (S*D not a multiple of the tile).
    k1, k2 = jax.random.split(key)
    x_r = jax.random.normal(k1, (2, 9, 32), dtype=jnp.float32)
    pe_r = PositionalEncoding(16, 32)
    out_r = jax.block_until_ready(pe_r(x_r))
    assert jnp.allclose(out_r, _reference_forward(x_r, pe_r.pe), atol=1e-6, rtol=1e-6)

    # Extra small check: small-batch seq-on-sublane path (D multiple of 128).
    x_s = jax.random.normal(k2, (2, 16, 128), dtype=jnp.float32)
    pe_s = PositionalEncoding(16, 128)
    out_s = jax.block_until_ready(pe_s(x_s))
    assert jnp.allclose(out_s, _reference_forward(x_s, pe_s.pe), atol=1e-6, rtol=1e-6)

    print("KERNEL_OK")
</pallas_src>

<mosaic_0001>
module attributes {stable_mosaic.version = 11 : i64} {
  func.func @_pe_add_lane_kernel(%arg0: i32, %arg1: memref<2x128xf32, #tpu.memory_space<vmem>>, %arg2: memref<1x128xf32, #tpu.memory_space<vmem>>, %arg3: memref<2x128xf32, #tpu.memory_space<vmem>>) attributes {dimension_semantics = [#tpu.dimension_semantics<parallel>], iteration_bounds = array<i64: 2>, scalar_prefetch = 0 : i64, scratch_operands = 0 : i64, tpu.core_type = #tpu.core_type<tc>, window_params = [{transform_indices = @transform_0, window_bounds = array<i64: 2, 128>}, {transform_indices = @transform_1, window_bounds = array<i64: 1, 128>}, {transform_indices = @transform_2, window_bounds = array<i64: 2, 128>}]} {
    %c0 = arith.constant 0 : index
    %c0_0 = arith.constant 0 : index
    %0 = vector.load %arg1[%c0, %c0_0] : memref<2x128xf32, #tpu.memory_space<vmem>>, vector<2x128xf32>
    %c0_1 = arith.constant 0 : index
    %c0_2 = arith.constant 0 : index
    %1 = vector.load %arg2[%c0_1, %c0_2] : memref<1x128xf32, #tpu.memory_space<vmem>>, vector<1x128xf32>
    %2 = vector.broadcast %1 : vector<1x128xf32> to vector<2x128xf32>
    %3 = arith.addf %0, %2 : vector<2x128xf32>
    %c0_3 = arith.constant 0 : index
    %c0_4 = arith.constant 0 : index
    %4 = vector.load %arg3[%c0_3, %c0_4] : memref<2x128xf32, #tpu.memory_space<vmem>>, vector<2x128xf32>
    tpu.vector_store %arg3[%c0_3, %c0_4], %3 {strides = array<i32>} : memref<2x128xf32, #tpu.memory_space<vmem>>, vector<2x128xf32>,
    return
  }
  func.func @transform_0(%arg0: i32) -> (i32, i32) {
    %c0_i32 = arith.constant 0 : i32
    %c0_i32_0 = arith.constant 0 : i32
    return %c0_i32, %arg0 : i32, i32
  }
  func.func @transform_1(%arg0: i32) -> (i32, i32) {
    %c0_i32 = arith.constant 0 : i32
    %c0_i32_0 = arith.constant 0 : i32
    return %c0_i32, %arg0 : i32, i32
  }
  func.func @transform_2(%arg0: i32) -> (i32, i32) {
    %c0_i32 = arith.constant 0 : i32
    %c0_i32_0 = arith.constant 0 : i32
    return %c0_i32, %arg0 : i32, i32
  }
}

</mosaic_0001>

<llo_original>
// kernel: tpu_custom_call.1
$region0: #{tpu_custom_call.1}
  #allocation0 [shape = 'u32[]', space=smem, size = 0x4, offset = 0x4, fixed_abs, tag = 'smem constant byte address 0x4 - core index']
  #allocation1 [shape = 'u32[72,128]{1,0:T(1,128)}', space=vmem, size = 0x9000, scoped, tag = 'internal scratch']
  %s0 = inlined_call_operand.hbm [shape: f32[2,256], index: 0, kind: input, shape index: {}]
  %s1 = inlined_call_operand.hbm [shape: f32[1,256], index: 1, kind: input, shape index: {}]
  %s2 = inlined_call_operand.hbm [shape: f32[2,256], index: 2, kind: output, shape index: {}]
  %s3 = sld [smem:[#allocation0]]
  $region49: #{tpu_custom_call.1} parent=0
    _
  %s5 = ssub.s32 1, %s3
  %s6 = scalar_select 0, %s5, %s3
  $region1: #{tpu_custom_call.1} parent=0
    #allocation2 [shape = 'u8[2048]{0}', space=vmem, size = 0x800, scoped, tag = 'input window, operand 0']
    #allocation3 [shape = 's32[2]{0}', space=sflag, size = 0x8, scoped, tag = 'scoped memory for tpu_custom_call.1']
    #allocation4 [shape = 's32[2]{0}', space=sflag, size = 0x8, scoped, tag = 'scoped memory for tpu_custom_call.1']
    #allocation5 [shape = 'u8[1024]{0}', space=vmem, size = 0x400, scoped, tag = 'input window, operand 1']
    #allocation6 [shape = 's32[2]{0}', space=sflag, size = 0x8, scoped, tag = 'scoped memory for tpu_custom_call.1']
    #allocation7 [shape = 'u8[2048]{0}', space=vmem, size = 0x800, scoped, tag = 'output window, operand 0']
    %7 = vsyncpa [#allocation3], 0
    %s8 = scalar_lea.sflag [#allocation3], 1
    %9 = vsyncpa %s8, 0
    %10 = vsyncpa [#allocation6], 0
    %s11 = scalar_lea.sflag [#allocation6], 1
    %12 = vsyncpa %s11, 0
    %13 = vsyncpa [#allocation4], 0
    %s14 = scalar_lea.sflag [#allocation4], 1
    %15 = vsyncpa %s14, 0
    loop: start=0, step=1, limit=4
    $region2: #{tpu_custom_call.1} parent=1 // loop_pre_header
      _
    $region3: #{tpu_custom_call.1} parent=1 // loop_header
      %s17 = sphi 0, %s21
      %p18 = scmp.ge.s32.totalorder %s17, 4
      %s27 = sphi 0, %s29
      %s30 = sphi 0, %s27
      %s31 = sphi 0, %s30
      %s47 = sphi 0, %s31
      %s53 = sphi 0, %s55
      %s56 = sphi 0, %s53
      %s57 = sphi 0, %s56
      %s73 = sphi 0, %s57
      %s79 = sphi 0, %s81
      %s82 = sphi 0, %s79
      %s83 = sphi 0, %s82
      %s99 = sphi 0, %s83
    $region4: #{tpu_custom_call.1} parent=1 // loop_header_branch
      %20 = sbr.rel (%p18) target = $region8
    $region5: #{tpu_custom_call.1} parent=1 // loop_body
      %s22 = ssub.s32 %s17, 1
      %s23 = ssub.s32 %s17, 2
      %s24 = sadd.s32 %s17, 1
      %s25 = ssub.s32 %s17, %s24
      %p26 = scmp.eq.s32.totalorder %s25, 0
      %s28 = sadd.s32 %s27, 1
      %s29 = scalar_select %p26, %s27, %s28
      %p32 = pneg %p26
      %p33 = scmp.eq.s32.totalorder %s17, 1
      %p34 = por %p32, %p33
      %p35 = scmp.ne.s32.totalorder %s27, %s30
      %p36 = scmp.eq.s32.totalorder %s17, 0
      %p37 = por %p35, %p36
      %p38 = scmp.ne.s32.totalorder %s27, %s30
      %p39 = scmp.eq.s32.totalorder %s22, 1
      %p40 = por %p38, %p39
      %p41 = scmp.ne.s32.totalorder %s30, %s31
      %p42 = scmp.eq.s32.totalorder %s22, 0
      %p43 = por %p41, %p42
      %p44 = scmp.ne.s32.totalorder %s30, %s31
      %p45 = scmp.eq.s32.totalorder %s23, 1
      %p46 = por %p44, %p45
      %p48 = scmp.ne.s32.totalorder %s31, %s47
      %p49 = scmp.eq.s32.totalorder %s23, 0
      %p50 = por %p48, %p49
      %s51 = ssub.s32 %s17, %s24
      %p52 = scmp.eq.s32.totalorder %s51, 0
      %s54 = sadd.s32 %s53, 1
      %s55 = scalar_select %p52, %s53, %s54
      %p58 = pneg %p52
      %p59 = scmp.eq.s32.totalorder %s17, 1
      %p60 = por %p58, %p59
      %p61 = scmp.ne.s32.totalorder %s53, %s56
      %p62 = scmp.eq.s32.totalorder %s17, 0
      %p63 = por %p61, %p62
      %p64 = scmp.ne.s32.totalorder %s53, %s56
      %p65 = scmp.eq.s32.totalorder %s22, 1
      %p66 = por %p64, %p65
      %p67 = scmp.ne.s32.totalorder %s56, %s57
      %p68 = scmp.eq.s32.totalorder %s22, 0
      %p69 = por %p67, %p68
      %p70 = scmp.ne.s32.totalorder %s56, %s57
      %p71 = scmp.eq.s32.totalorder %s23, 1
      %p72 = por %p70, %p71
      %p74 = scmp.ne.s32.totalorder %s57, %s73
      %p75 = scmp.eq.s32.totalorder %s23, 0
      %p76 = por %p74, %p75
      %s77 = ssub.s32 %s17, %s24
      %p78 = scmp.eq.s32.totalorder %s77, 0
      %s80 = sadd.s32 %s79, 1
      %s81 = scalar_select %p78, %s79, %s80
      %p84 = pneg %p78
      %p85 = scmp.eq.s32.totalorder %s17, 1
      %p86 = por %p84, %p85
      %p87 = scmp.ne.s32.totalorder %s79, %s82
      %p88 = scmp.eq.s32.totalorder %s17, 0
      %p89 = por %p87, %p88
      %p90 = scmp.ne.s32.totalorder %s79, %s82
      %p91 = scmp.eq.s32.totalorder %s22, 1
      %p92 = por %p90, %p91
      %p93 = scmp.ne.s32.totalorder %s82, %s83
      %p94 = scmp.eq.s32.totalorder %s22, 0
      %p95 = por %p93, %p94
      %p96 = scmp.ne.s32.totalorder %s82, %s83
      %p97 = scmp.eq.s32.totalorder %s23, 1
      %p98 = por %p96, %p97
      %p100 = scmp.ne.s32.totalorder %s83, %s99
      %p101 = scmp.eq.s32.totalorder %s23, 0
      %p102 = por %p100, %p101
      %p103 = scmp.le.s32.totalorder 1, %s17
      %p104 = scmp.lt.s32.totalorder %s17, 3
      %p105 = pnand %p103, %p104
      %p106 = pneg %p105
      // Predicated region
      $region9: #{tpu_custom_call.1} parent=5 // pred_check
        _
      $region10: #{tpu_custom_call.1} parent=5 // pred_check_branch
        %108 = sbr.rel (%p105) target = $region12
      $region11: #{tpu_custom_call.1} parent=5 // pred_region
        %s109 = ssub.s32 %s17, 1
      $region12: #{tpu_custom_call.1} parent=5 // pred_fallthru
        _
      %p110 = scmp.lt.s32.totalorder %s17, 2
      // Predicated region
      $region13: #{tpu_custom_call.1} parent=5 // pred_check
        %p111 = pneg %p110
      $region14: #{tpu_custom_call.1} parent=5 // pred_check_branch
        %113 = sbr.rel (%p111) target = $region16
      $region15: #{tpu_custom_call.1} parent=5 // pred_region
        // Predicated region
        $region17: #{tpu_custom_call.1} parent=15 // pred_check
          %p114 = pneg %p37
        $region18: #{tpu_custom_call.1} parent=15 // pred_check_branch
          %116 = sbr.rel (%p114) target = $region20
        $region19: #{tpu_custom_call.1} parent=15 // pred_region
          %s117 = sand.u32 %s27, 1
          %s118 = scalar_lea.sflag [#allocation3], %s117
          %s119 = sand.u32 %s27, 1
          %s120 = smul.addr %s119, 2
          %s121 = scalar_lea.vmem [#allocation2], %s120
          %123 = vsyncadd %s118, 0
          %s124 = smul.addr %s17, 2
          %s125 = scalar_lea.hbm %s0, %s124
          %s127 = sshll.u32 %s125, 4
          %s128 = int_to_ptr.hbm [resolvable:$true] %s127
          %s129 = sshll.u32 %s121, 4
          %s130 = int_to_ptr.vmem [resolvable:$true] %s129
          %132 = dma.hbm_to_vmem [thread:$0]  %s128, 32, %s130, %s118
        $region20: #{tpu_custom_call.1} parent=15 // pred_fallthru
          _
        // Predicated region
        $region21: #{tpu_custom_call.1} parent=15 // pred_check
          %p133 = pneg %p63
        $region22: #{tpu_custom_call.1} parent=15 // pred_check_branch
          %135 = sbr.rel (%p133) target = $region24
        $region23: #{tpu_custom_call.1} parent=15 // pred_region
          %s136 = sand.u32 %s53, 1
          %s137 = scalar_lea.sflag [#allocation6], %s136
          %s138 = sand.u32 %s53, 1
          %s139 = scalar_lea.vmem [#allocation5], %s138
          %141 = vsyncadd %s137, 0
          %s142 = scalar_lea.hbm %s1, %s17
          %s144 = sshll.u32 %s142, 4
          %s145 = int_to_ptr.hbm [resolvable:$true] %s144
          %s146 = sshll.u32 %s139, 4
          %s147 = int_to_ptr.vmem [resolvable:$true] %s146
          %149 = dma.hbm_to_vmem [thread:$0]  %s145, 16, %s147, %s137
        $region24: #{tpu_custom_call.1} parent=15 // pred_fallthru
          _
      $region16: #{tpu_custom_call.1} parent=5 // pred_fallthru
        _
      %p150 = scmp.le.s32.totalorder 1, %s17
      %p151 = scmp.lt.s32.totalorder %s17, 3
      %p152 = pnand %p150, %p151
      %p153 = pneg %p152
      // Predicated region
      $region25: #{tpu_custom_call.1} parent=5 // pred_check
        _
      $region26: #{tpu_custom_call.1} parent=5 // pred_check_branch
        %155 = sbr.rel (%p152) target = $region28
      $region27: #{tpu_custom_call.1} parent=5 // pred_region
        %s156 = ssub.s32 %s17, 1
        %s157 = sand.u32 %s30, 1
        %s158 = scalar_lea.sflag [#allocation3], %s157
        %s159 = sand.u32 %s30, 1
        %s160 = smul.addr %s159, 2
        %s161 = scalar_lea.vmem [#allocation2], %s160
        // Predicated region
        $region29: #{tpu_custom_call.1} parent=27 // pred_check
          %p162 = pneg %p43
        $region30: #{tpu_custom_call.1} parent=27 // pred_check_branch
          %164 = sbr.rel (%p162) target = $region32
        $region31: #{tpu_custom_call.1} parent=27 // pred_region
          %166 = dma.done %s158, 32
        $region32: #{tpu_custom_call.1} parent=27 // pred_fallthru
          _
        %s167 = sand.u32 %s56, 1
        %s168 = scalar_lea.sflag [#allocation6], %s167
        %s169 = sand.u32 %s56, 1
        %s170 = scalar_lea.vmem [#allocation5], %s169
        // Predicated region
        $region33: #{tpu_custom_call.1} parent=27 // pred_check
          %p171 = pneg %p69
        $region34: #{tpu_custom_call.1} parent=27 // pred_check_branch
          %173 = sbr.rel (%p171) target = $region36
        $region35: #{tpu_custom_call.1} parent=27 // pred_region
          %175 = dma.done %s168, 16
        $region36: #{tpu_custom_call.1} parent=27 // pred_fallthru
          _
        %s176 = sand.u32 %s30, 1
        %s177 = scalar_lea.sflag [#allocation3], %s176
        %s178 = sand.u32 %s30, 1
        %s179 = smul.addr %s178, 2
        %s180 = scalar_lea.vmem [#allocation2], %s179
        %p181 = pneg %p43
        %p182 = pneg %p40
        %s183 = sand.u32 %s56, 1
        %s184 = scalar_lea.sflag [#allocation6], %s183
        %s185 = sand.u32 %s56, 1
        %s186 = scalar_lea.vmem [#allocation5], %s185
        %p187 = pneg %p69
        %p188 = pneg %p66
        %p189 = pneg %p95
        %p190 = pneg %p92
        %s191 = sand.u32 %s82, 1
        %s192 = scalar_lea.sflag [#allocation4], %s191
        %s193 = sand.u32 %s82, 1
        %s194 = smul.addr %s193, 2
        %s195 = scalar_lea.vmem [#allocation7], %s194
        %v196 = vld [vmem:[%s161] sm:$0x3]
        %v197 = vld [vmem:[%s170] sm:$0x1]
        %v199 = vperm.slane %v197, 0
        %v201 = vadd.f32 %v196, %v199
        %202 = vst [vmem:[%s195] sm:$0x3] %v201
        %s203 = sand.u32 %s82, 1
        %s204 = scalar_lea.sflag [#allocation4], %s203
        %s205 = sand.u32 %s82, 1
        %s206 = smul.addr %s205, 2
        %s207 = scalar_lea.vmem [#allocation7], %s206
        // Predicated region
        $region37: #{tpu_custom_call.1} parent=27 // pred_check
          %p208 = pneg %p92
        $region38: #{tpu_custom_call.1} parent=27 // pred_check_branch
          %210 = sbr.rel (%p208) target = $region40
        $region39: #{tpu_custom_call.1} parent=27 // pred_region
          %212 = vsyncadd %s204, 0
          %s213 = smul.addr %s22, 2
          %s214 = scalar_lea.hbm %s2, %s213
          %s216 = sshll.u32 %s207, 4
          %s217 = int_to_ptr.vmem [resolvable:$true] %s216
          %s218 = sshll.u32 %s214, 4
          %s219 = int_to_ptr.hbm [resolvable:$true] %s218
          %221 = dma.vmem_to_hbm [thread:$0]  %s217, 32, %s219, %s204
        $region40: #{tpu_custom_call.1} parent=27 // pred_fallthru
          _
      $region28: #{tpu_custom_call.1} parent=5 // pred_fallthru
        _
      %p222 = scmp.le.s32.totalorder 2, %s17
      // Predicated region
      $region41: #{tpu_custom_call.1} parent=5 // pred_check
        %p223 = pneg %p222
      $region42: #{tpu_custom_call.1} parent=5 // pred_check_branch
        %225 = sbr.rel (%p223) target = $region44
      $region43: #{tpu_custom_call.1} parent=5 // pred_region
        %s226 = ssub.s32 %s17, 2
        // Predicated region
        $region45: #{tpu_custom_call.1} parent=43 // pred_check
          %p227 = pneg %p98
        $region46: #{tpu_custom_call.1} parent=43 // pred_check_branch
          %229 = sbr.rel (%p227) target = $region48
        $region47: #{tpu_custom_call.1} parent=43 // pred_region
          %s230 = sand.u32 %s83, 1
          %s231 = scalar_lea.sflag [#allocation4], %s230
          %s232 = sand.u32 %s83, 1
          %s233 = smul.addr %s232, 2
          %s234 = scalar_lea.vmem [#allocation7], %s233
          %236 = dma.done %s231, 32
        $region48: #{tpu_custom_call.1} parent=43 // pred_fallthru
          _
      $region44: #{tpu_custom_call.1} parent=5 // pred_fallthru
        _
    $region6: #{tpu_custom_call.1} parent=1 // loop_footer
      %s21 = sadd.s32 1, %s17
    $region7: #{tpu_custom_call.1} parent=1 // loop_footer_branch
      %16 = sbr.rel target = $region3
    $region8: #{tpu_custom_call.1} parent=1 // loop_exit
      _
    %237 = vsyncpa [#allocation3], 1
    %s238 = scalar_lea.sflag [#allocation3], 1
    %239 = vsyncpa %s238, 1
    %240 = vsyncpa [#allocation6], 1
    %s241 = scalar_lea.sflag [#allocation6], 1
    %242 = vsyncpa %s241, 1
    %243 = vsyncpa [#allocation4], 1
    %s244 = scalar_lea.sflag [#allocation4], 1
    %245 = vsyncpa %s244, 1

</llo_original>
